<compile_context>
chip_gen: v5e
topology: v5e:2x2
jax: 0.10.0
libtpu: 0.0.40
codegen_flags: <defaults>
</compile_context>

<pallas_src>
import math

import jax
import jax.numpy as jnp
from jax.experimental import pallas as pl
from jax.experimental.pallas import tpu as pltpu


def _pe_add_kernel(x_ref, pe_ref, o_ref):
    # x_ref: (B, TS, D), pe_ref: (1, TS, D) -> broadcast add over batch slabs.
    o_ref[...] = x_ref[...] + pe_ref[...]


def _pe_dropout_kernel(x_ref, pe_ref, drop_ref, o_ref):
    # drop_ref holds the pre-scaled inverted-dropout multiplier
    # (0 or 1/(1-p)) in the input dtype: the whole train path stays in the
    # native dtype (bf16 VALU exists on v6e/v7x; no f32 upcast needed).
    o_ref[...] = (x_ref[...] + pe_ref[...]) * drop_ref[...]


def make_position_embedding(embedding_dim: int, max_len: int = 5000,
                            dtype=jnp.float32):
    """Sinusoidal position-embedding buffer, shape (1, max_len, D).

    Stored directly in the model dtype so the forward pass never re-casts it.
    """
    position = jnp.arange(0, max_len, dtype=jnp.float32).reshape(max_len, 1)
    div_term = jnp.exp(
        -jnp.arange(0, embedding_dim, 2, dtype=jnp.float32)
        * math.log(10000.0) / embedding_dim)
    pe = jnp.zeros((max_len, embedding_dim), dtype=jnp.float32)
    pe = pe.at[:, 0::2].set(jnp.sin(position * div_term))
    pe = pe.at[:, 1::2].set(jnp.cos(position * div_term))
    return pe[None, :, :].astype(dtype)  # (1, max_len, D)


def _target_tile_bytes() -> int:
    """Generation-aware per-array tile budget."""
    try:
        vmem = int(pltpu.get_tpu_info().vmem_capacity_bytes)
    except Exception:
        vmem = 0  # no TPU info available (e.g. interpret mode) -> conservative
    if vmem and vmem <= 64 * 1024 * 1024:
        # v7x-class: small VMEM but huge per-TC HBM bandwidth -> bigger tiles
        # to amortize per-grid-step pipeline overhead.
        return 6 * 1024 * 1024
    if vmem:
        # v5e/v6e: 2-3 MiB tiles already sit at >=85% of HBM roofline.
        return 3 * 1024 * 1024
    return 2 * 1024 * 1024


def _pick_seq_tile(seq_len: int, batch: int, dim: int, itemsize: int,
                   target_bytes: int) -> int:
    """Seq-tile rows (sublane dim): dtype-aligned multiple, ~target_bytes/x-tile."""
    row_align = max(8, 32 // max(1, itemsize))  # 8 for f32, 16 bf16, 32 int8
    rows = target_bytes // max(1, batch * dim * itemsize)
    ts = max(row_align, (rows // row_align) * row_align)
    ts = min(ts, max(row_align, (seq_len // row_align) * row_align))
    return int(ts)


def positional_encoding(token_embedding, position_embedding, *, p: float = 0.1,
                        train: bool = False, dropout_key=None):
    """Pallas forward: out = dropout(token_embedding + pe[:, :S, :])."""
    B, S, D = token_embedding.shape
    dtype = token_embedding.dtype
    assert position_embedding.shape[-1] == D
    assert position_embedding.shape[1] >= S

    pe = position_embedding
    if pe.dtype != dtype:
        pe = pe.astype(dtype)  # one-time cast; build the buffer in model dtype to avoid

    if train and p >= 1.0:
        # Degenerate torch case: everything is dropped.
        return jnp.zeros_like(token_embedding)
    use_dropout = train and p > 0.0

    itemsize = jnp.dtype(dtype).itemsize
    row_align = max(8, 32 // max(1, itemsize))
    if S >= row_align:
        ts = _pick_seq_tile(S, B, D, itemsize, _target_tile_bytes())
        pe_arg = pe                  # full (1, max_len, D): BlockSpec indexes it
    else:
        # Tiny sequences: block extent == array extent (allowed), slice PE so
        # its block shape matches its full dims.
        ts = S
        pe_arg = pe[:, :S, :]

    grid = (pl.cdiv(S, ts),)
    x_spec = pl.BlockSpec((B, ts, D), lambda s: (0, s, 0))
    pe_spec = pl.BlockSpec((1, ts, D), lambda s: (0, s, 0))
    out_spec = pl.BlockSpec((B, ts, D), lambda s: (0, s, 0))

    compiler_params = pltpu.CompilerParams(
        dimension_semantics=("parallel",),
        vmem_limit_bytes=48 * 1024 * 1024)  # covers double-buffered x+out(+drop); <64 MiB v7x
    out_shape = jax.ShapeDtypeStruct((B, S, D), dtype)

    if not use_dropout:
        # Eval path (dropout is identity): pure broadcast add, native dtype.
        return pl.pallas_call(
            _pe_add_kernel,
            out_shape=out_shape,
            grid_spec=pltpu.PrefetchScalarGridSpec(
                num_scalar_prefetch=0,
                grid=grid,
                in_specs=[x_spec, pe_spec],
                out_specs=out_spec),
            compiler_params=compiler_params,
        )(token_embedding, pe_arg)

    # Train path: inverted-dropout multiplier (0 or 1/(1-p)) built in plain JAX,
    # streamed through the same seq-tiled pipeline in the input dtype.
    if dropout_key is None:
        dropout_key = jax.random.PRNGKey(0)
    keep = jax.random.bernoulli(dropout_key, 1.0 - p, (B, S, D))
    drop = keep.astype(dtype) * jnp.asarray(1.0 / (1.0 - p), dtype=dtype)
    return pl.pallas_call(
        _pe_dropout_kernel,
        out_shape=out_shape,
        grid_spec=pltpu.PrefetchScalarGridSpec(
            num_scalar_prefetch=0,
            grid=grid,
            in_specs=[x_spec, pe_spec, x_spec],
            out_specs=out_spec),
        compiler_params=compiler_params,
    )(token_embedding, pe_arg, drop)


if __name__ == "__main__":
    # Small shapes consistent with the module's forward: (batch, seq, hidden).
    B, S, D = 2, 8, 32
    MAX_LEN = 64

    key = jax.random.PRNGKey(0)
    token_embedding = jax.random.normal(key, (B, S, D), dtype=jnp.float32)

    # Deterministic "parameters" (buffer) — built in-script, no checkpoint.
    pe_buffer = make_position_embedding(D, MAX_LEN, dtype=jnp.float32)

    # Eval-mode forward (dropout is identity), matches torch module in .eval().
    out = positional_encoding(token_embedding, pe_buffer, p=0.1, train=False)
    out = jax.block_until_ready(out)

    ref = token_embedding + pe_buffer[:, :S, :]
    assert out.shape == (B, S, D)
    assert jnp.allclose(out, ref, atol=1e-6, rtol=1e-6)

    # Train-mode forward: deterministic check since the dropout multiplier is
    # derived from an explicit key (recomputed identically for the reference).
    p = 0.5
    dkey = jax.random.PRNGKey(123)
    out_tr = positional_encoding(token_embedding, pe_buffer, p=p, train=True,
                                 dropout_key=dkey)
    out_tr = jax.block_until_ready(out_tr)
    keep_ref = jax.random.bernoulli(dkey, 1.0 - p, (B, S, D)).astype(jnp.float32)
    ref_tr = (token_embedding + pe_buffer[:, :S, :]) * keep_ref / (1.0 - p)
    assert out_tr.shape == (B, S, D)
    assert jnp.allclose(out_tr, ref_tr, atol=1e-6, rtol=1e-6)

    print("KERNEL_OK")
</pallas_src>

<mosaic_0001>
module attributes {stable_mosaic.version = 11 : i64} {
  func.func @_pe_add_kernel(%arg0: i32, %arg1: memref<2x8x32xf32, #tpu.memory_space<vmem>>, %arg2: memref<1x8x32xf32, #tpu.memory_space<vmem>>, %arg3: memref<2x8x32xf32, #tpu.memory_space<vmem>>) attributes {dimension_semantics = [#tpu.dimension_semantics<parallel>], iteration_bounds = array<i64: 1>, scalar_prefetch = 0 : i64, scratch_operands = 0 : i64, tpu.core_type = #tpu.core_type<tc>, window_params = [{transform_indices = @transform_0, window_bounds = array<i64: 2, 8, 32>}, {transform_indices = @transform_1, window_bounds = array<i64: 1, 8, 32>}, {transform_indices = @transform_2, window_bounds = array<i64: 2, 8, 32>}]} {
    %c0 = arith.constant 0 : index
    %c0_0 = arith.constant 0 : index
    %c0_1 = arith.constant 0 : index
    %0 = vector.load %arg1[%c0, %c0_0, %c0_1] : memref<2x8x32xf32, #tpu.memory_space<vmem>>, vector<2x8x32xf32>
    %c0_2 = arith.constant 0 : index
    %c0_3 = arith.constant 0 : index
    %c0_4 = arith.constant 0 : index
    %1 = vector.load %arg2[%c0_2, %c0_3, %c0_4] : memref<1x8x32xf32, #tpu.memory_space<vmem>>, vector<1x8x32xf32>
    %2 = vector.broadcast %1 : vector<1x8x32xf32> to vector<2x8x32xf32>
    %3 = arith.addf %0, %2 : vector<2x8x32xf32>
    %c0_5 = arith.constant 0 : index
    %c0_6 = arith.constant 0 : index
    %c0_7 = arith.constant 0 : index
    %4 = vector.load %arg3[%c0_5, %c0_6, %c0_7] : memref<2x8x32xf32, #tpu.memory_space<vmem>>, vector<2x8x32xf32>
    tpu.vector_store %arg3[%c0_5, %c0_6, %c0_7], %3 {strides = array<i32>} : memref<2x8x32xf32, #tpu.memory_space<vmem>>, vector<2x8x32xf32>,
    return
  }
  func.func @transform_0(%arg0: i32) -> (i32, i32, i32) {
    %c0_i32 = arith.constant 0 : i32
    %c0_i32_0 = arith.constant 0 : i32
    %c0_i32_1 = arith.constant 0 : i32
    return %c0_i32, %arg0, %c0_i32_0 : i32, i32, i32
  }
  func.func @transform_1(%arg0: i32) -> (i32, i32, i32) {
    %c0_i32 = arith.constant 0 : i32
    %c0_i32_0 = arith.constant 0 : i32
    %c0_i32_1 = arith.constant 0 : i32
    return %c0_i32, %arg0, %c0_i32_0 : i32, i32, i32
  }
  func.func @transform_2(%arg0: i32) -> (i32, i32, i32) {
    %c0_i32 = arith.constant 0 : i32
    %c0_i32_0 = arith.constant 0 : i32
    %c0_i32_1 = arith.constant 0 : i32
    return %c0_i32, %arg0, %c0_i32_0 : i32, i32, i32
  }
}

</mosaic_0001>

<llo_original>
// kernel: tpu_custom_call.1
$region0: #{tpu_custom_call.1}
  #allocation0 [shape = 'u32[]', space=smem, size = 0x4, offset = 0x4, fixed_abs, tag = 'smem constant byte address 0x4 - core index']
  #allocation1 [shape = 'u32[72,128]{1,0:T(1,128)}', space=vmem, size = 0x9000, scoped, tag = 'internal scratch']
  %s0 = inlined_call_operand.vmem [shape: f32[2,8,32], index: 0, kind: input, shape index: {}]
  %s1 = inlined_call_operand.vmem [shape: f32[1,64,32], index: 1, kind: input, shape index: {}]
  %s2 = inlined_call_operand.hbm [shape: f32[2,8,32], index: 2, kind: output, shape index: {}]
  %s3 = sld [smem:[#allocation0]]
  $region18: #{tpu_custom_call.1} parent=0
    _
  %s5 = ssub.s32 1, %s3
  %s6 = scalar_select 0, %s5, %s3
  $region1: #{tpu_custom_call.1} parent=0
    #allocation2 [shape = 'u8[8192]{0}', space=vmem, size = 0x2000, scoped, tag = 'output window, operand 0, single buffered']
    #allocation3 [shape = 's32[1]{0}', space=sflag, size = 0x4, scoped, tag = 'scoped memory for tpu_custom_call.1']
    %7 = vsyncpa [#allocation3], 0
    // Predicated region
    $region2: #{tpu_custom_call.1} parent=1 // pred_check
      _
    $region3: #{tpu_custom_call.1} parent=1 // pred_check_branch
      %9 = sbr.rel (0) target = $region5
    $region4: #{tpu_custom_call.1} parent=1 // pred_region
      _
    $region5: #{tpu_custom_call.1} parent=1 // pred_fallthru
      _
    // Predicated region
    $region6: #{tpu_custom_call.1} parent=1 // pred_check
      _
    $region7: #{tpu_custom_call.1} parent=1 // pred_check_branch
      %11 = sbr.rel (0) target = $region9
    $region8: #{tpu_custom_call.1} parent=1 // pred_region
      _
    $region9: #{tpu_custom_call.1} parent=1 // pred_fallthru
      _
    %v12 = vld [vmem:[%s0] sm:$0xff]
    %v13 = vld [vmem:[%s0 + $0x8] sm:$0xff]
    %v14 = vld [vmem:[%s1] sm:$0xff]
    %v15 = vadd.f32 %v12, %v14
    %v16 = vadd.f32 %v13, %v14
    %vm17 = vcmask 261120
    %18 = vst.msk [vmem:[#allocation2] sm:$0xff] %vm17, %v15
    %19 = vst.msk [vmem:[#allocation2 + $0x8] sm:$0xff] %vm17, %v16
    // Predicated region
    $region10: #{tpu_custom_call.1} parent=1 // pred_check
      _
    $region11: #{tpu_custom_call.1} parent=1 // pred_check_branch
      %21 = sbr.rel (0) target = $region13
    $region12: #{tpu_custom_call.1} parent=1 // pred_region
      %23 = vsyncadd [#allocation3], 0
      %s24 = sshll.u32 [#allocation2], 4
      %s25 = int_to_ptr.vmem [resolvable:$true] %s24
      %s26 = sshll.u32 %s2, 4
      %s27 = int_to_ptr.hbm [resolvable:$true] %s26
      %32 = dma.vmem_to_hbm [thread:$0]  %s25, 256, %s27, [#allocation3], 128, 128, 8
    $region13: #{tpu_custom_call.1} parent=1 // pred_fallthru
      _
    // Predicated region
    $region14: #{tpu_custom_call.1} parent=1 // pred_check
      _
    $region15: #{tpu_custom_call.1} parent=1 // pred_check_branch
      %34 = sbr.rel (0) target = $region17
    $region16: #{tpu_custom_call.1} parent=1 // pred_region
      %36 = dma.done [#allocation3], 256
    $region17: #{tpu_custom_call.1} parent=1 // pred_fallthru
      _
    %37 = vsyncpa [#allocation3], 1

</llo_original>
